<compile_context>
chip_gen: v7x
topology: tpu7x:2x2x1
jax: 0.10.0
libtpu: 0.0.40
codegen_flags: <defaults>
</compile_context>

<pallas_src>
import jax
import jax.numpy as jnp
from jax.experimental import pallas as pl
from jax.experimental.pallas import tpu as pltpu

_LANE = 128      # lane width of a vreg
_SUBLANE = 8     # f32 sublanes per vreg
_MAX_C = 4096    # max lane-dense slab width
_TARGET_TILE_BYTES = 4 * 1024 * 1024   # ~4 MiB/tile: v7x-safe, amortizes step overhead


def _rezero_scale_kernel(g_ref, y_ref, o_ref):
    # g_ref: (1,) f32 scalar in SMEM;  y_ref / o_ref: (TM, C) VMEM tiles.
    # Multiply in f32 (matches the f32 Parameter), cast only the result.
    y = y_ref[...].astype(jnp.float32)
    o_ref[...] = (y * g_ref[0]).astype(o_ref.dtype)


def rezero_scale(y, g):
    """Elementwise y * g (scalar) via a Pallas TPU kernel (HBM-bandwidth bound)."""
    orig_shape = y.shape
    n = y.size
    flat = y.reshape(-1)
    itemsize = flat.dtype.itemsize

    # --- lane-dense slab width: widest power-of-two multiple of 128 (<= _MAX_C)
    #     that still leaves at least a vreg's worth of rows.
    c = _LANE
    while c * 2 <= _MAX_C and n >= c * 2 * _SUBLANE:
        c *= 2

    rows = pl.cdiv(n, c)

    # --- tile rows: target ~4 MiB per buffer, multiple of the sublane count.
    tm = _TARGET_TILE_BYTES // (c * itemsize)
    tm = min(tm, rows)
    tm = max(_SUBLANE, (tm // _SUBLANE) * _SUBLANE)

    # --- prefer >= 2 grid blocks so v7x can shard the parallel axis over
    #     both TensorCores (only when there is enough data to split).
    if pl.cdiv(rows, tm) < 2 and rows >= 2 * _SUBLANE:
        tm = max(_SUBLANE, ((rows + 1) // 2 // _SUBLANE) * _SUBLANE)

    # --- pad the flat slab so (rows_padded, c) divides evenly into (tm, c) tiles.
    num_blocks = pl.cdiv(rows, tm)
    rows_padded = num_blocks * tm
    padded_n = rows_padded * c
    if padded_n != n:
        flat = jnp.pad(flat, (0, padded_n - n))
    y2 = flat.reshape(rows_padded, c)

    g_smem = jnp.asarray(g, dtype=jnp.float32).reshape(1)

    out = pl.pallas_call(
        _rezero_scale_kernel,
        out_shape=jax.ShapeDtypeStruct((rows_padded, c), y.dtype),
        grid=(num_blocks,),
        in_specs=[
            pl.BlockSpec(memory_space=pltpu.SMEM),        # scalar g (f32)
            pl.BlockSpec((tm, c), lambda i: (i, 0)),      # fn(x) tile, lane-dense
        ],
        out_specs=pl.BlockSpec((tm, c), lambda i: (i, 0)),
        compiler_params=pltpu.CompilerParams(
            dimension_semantics=("parallel",)),
    )(g_smem, y2)

    return out.reshape(-1)[:n].reshape(orig_shape)


class ReZero:
    """JAX/Pallas port of the PyTorch ReZero module."""

    def __init__(self, fn):
        # matches nn.Parameter(torch.tensor(0.001)) — deterministic f32 init
        self.g = jnp.asarray(0.001, dtype=jnp.float32)
        self.fn = fn

    def __call__(self, x, **kwargs):
        y = self.fn(x, **kwargs)          # wrapped sublayer (plain-JAX glue)
        return rezero_scale(y, self.g)    # ReZero's scale: Pallas kernel


if __name__ == "__main__":
    key = jax.random.PRNGKey(0)
    # transformer-style input: (batch=2, seq=8, hidden=32)
    x = jax.random.normal(key, (2, 8, 32), dtype=jnp.float32)

    # Example wrapped sublayer (ReZero defines no params of its own for fn).
    fn = jnp.tanh

    block = ReZero(fn)
    out = jax.block_until_ready(block(x))

    ref = jnp.tanh(x) * jnp.float32(0.001)
    assert out.shape == x.shape and out.dtype == x.dtype
    assert jnp.allclose(out, ref, atol=1e-6, rtol=1e-6)
    print("KERNEL_OK")
</pallas_src>

<mosaic_0001>
module attributes {stable_mosaic.version = 11 : i64} {
  func.func @_rezero_scale_kernel(%arg0: i32, %arg1: memref<1xf32, #tpu.memory_space<smem>>, %arg2: memref<8x128xf32, #tpu.memory_space<vmem>>, %arg3: memref<8x128xf32, #tpu.memory_space<vmem>>) attributes {dimension_semantics = [#tpu.dimension_semantics<parallel>], iteration_bounds = array<i64: 1>, scalar_prefetch = 0 : i64, scratch_operands = 0 : i64, tpu.core_type = #tpu.core_type<tc>, window_params = [{transform_indices = @transform_0, window_bounds = array<i64: 1>}, {transform_indices = @transform_1, window_bounds = array<i64: 8, 128>}, {transform_indices = @transform_2, window_bounds = array<i64: 8, 128>}]} {
    %c0 = arith.constant 0 : index
    %c0_0 = arith.constant 0 : index
    %0 = vector.load %arg2[%c0, %c0_0] : memref<8x128xf32, #tpu.memory_space<vmem>>, vector<8x128xf32>
    %c0_1 = arith.constant 0 : index
    %1 = memref.load %arg1[%c0_1] : memref<1xf32, #tpu.memory_space<smem>>
    %2 = vector.broadcast %1 : f32 to vector<8x128xf32>
    %3 = arith.mulf %0, %2 : vector<8x128xf32>
    %c0_2 = arith.constant 0 : index
    %c0_3 = arith.constant 0 : index
    %4 = vector.load %arg3[%c0_2, %c0_3] : memref<8x128xf32, #tpu.memory_space<vmem>>, vector<8x128xf32>
    tpu.vector_store %arg3[%c0_2, %c0_3], %3 {strides = array<i32>} : memref<8x128xf32, #tpu.memory_space<vmem>>, vector<8x128xf32>,
    return
  }
  func.func @transform_0(%arg0: i32) -> i32 {
    %c0_i32 = arith.constant 0 : i32
    %c0_i32_0 = arith.constant 0 : i32
    return %c0_i32 : i32
  }
  func.func @transform_1(%arg0: i32) -> (i32, i32) {
    %c0_i32 = arith.constant 0 : i32
    %c0_i32_0 = arith.constant 0 : i32
    return %arg0, %c0_i32 : i32, i32
  }
  func.func @transform_2(%arg0: i32) -> (i32, i32) {
    %c0_i32 = arith.constant 0 : i32
    %c0_i32_0 = arith.constant 0 : i32
    return %arg0, %c0_i32 : i32, i32
  }
}

</mosaic_0001>

<llo_original>
// kernel: tpu_custom_call.1
$region0: #{tpu_custom_call.1}
  #allocation0 [shape = 'u32[]', space=smem, size = 0x4, offset = 0x4, fixed_abs, tag = 'smem constant byte address 0x4 - core index']
  #allocation1 [shape = 'u32[144,128]{1,0:T(1,128)}', space=vmem, size = 0x12000, scoped, tag = 'internal scratch']
  #allocation2 [shape = 'f32[1]{0:T(128)S(6)}', space=smem, size = 0x200, scoped, tag = 'scoped memory for tpu_custom_call.1']
  %s0 = inlined_call_operand.<no memory space> [shape: f32[1], index: 0, kind: input, shape index: {}]
  %s1 = inlined_call_operand.hbm [shape: f32[8,128], index: 1, kind: input, shape index: {}]
  %s2 = inlined_call_operand.hbm [shape: f32[8,128], index: 2, kind: output, shape index: {}]
  %s3 = sld [smem:[#allocation0]]
  $region22: #{tpu_custom_call.1} parent=0
    _
  %s5 = ssub.s32 1, %s3
  %s6 = scalar_select 0, %s5, %s3
  %7 = sst [smem:[#allocation2]] %s0
  $region1: #{tpu_custom_call.1} parent=0
    #allocation3 [shape = 'u8[4096]{0}', space=vmem, size = 0x1000, scoped, tag = 'input window, operand 1, single buffered']
    #allocation4 [shape = 's32[1]{0}', space=sflag, size = 0x4, scoped, tag = 'scoped memory for tpu_custom_call.1']
    #allocation5 [shape = 's32[1]{0}', space=sflag, size = 0x4, scoped, tag = 'scoped memory for tpu_custom_call.1']
    #allocation6 [shape = 'u8[4096]{0}', space=vmem, size = 0x1000, scoped, tag = 'output window, operand 0, single buffered']
    %8 = vsyncpa [#allocation4], 0
    %9 = vsyncpa [#allocation5], 0
    // Predicated region
    $region2: #{tpu_custom_call.1} parent=1 // pred_check
      _
    $region3: #{tpu_custom_call.1} parent=1 // pred_check_branch
      %11 = sbr.rel (0) target = $region5
    $region4: #{tpu_custom_call.1} parent=1 // pred_region
      _
    $region5: #{tpu_custom_call.1} parent=1 // pred_fallthru
      _
    // Predicated region
    $region6: #{tpu_custom_call.1} parent=1 // pred_check
      _
    $region7: #{tpu_custom_call.1} parent=1 // pred_check_branch
      %13 = sbr.rel (0) target = $region9
    $region8: #{tpu_custom_call.1} parent=1 // pred_region
      %s15 = ssub.s32 128, 128
      %16 = vsyncadd [#allocation4], %s15
      %s18 = sshll.u32 [#allocation3], 4
      %s19 = int_to_ptr.vmem [resolvable:$true] %s18
      %21 = dma.hbm_to_vmem [thread:$0]  %s1, 128, %s19, [#allocation4]
    $region9: #{tpu_custom_call.1} parent=1 // pred_fallthru
      _
    // Predicated region
    $region10: #{tpu_custom_call.1} parent=1 // pred_check
      _
    $region11: #{tpu_custom_call.1} parent=1 // pred_check_branch
      %23 = sbr.rel (0) target = $region13
    $region12: #{tpu_custom_call.1} parent=1 // pred_region
      %24 = dma.done [#allocation4], 128
    $region13: #{tpu_custom_call.1} parent=1 // pred_fallthru
      _
    %v25 = vld [vmem:[#allocation3] sm:$0xff]
    %s26 = sld [smem:[#allocation2]]
    %v27 = vstv %s26
    %v28 = vmul.f32 %v25, %v27
    %29 = vst [vmem:[#allocation6] sm:$0xff] %v28
    // Predicated region
    $region14: #{tpu_custom_call.1} parent=1 // pred_check
      _
    $region15: #{tpu_custom_call.1} parent=1 // pred_check_branch
      %31 = sbr.rel (0) target = $region17
    $region16: #{tpu_custom_call.1} parent=1 // pred_region
      %s33 = ssub.s32 128, 128
      %34 = vsyncadd [#allocation5], %s33
      %s36 = sshll.u32 [#allocation6], 4
      %s37 = int_to_ptr.vmem [resolvable:$true] %s36
      %39 = dma.vmem_to_hbm [thread:$0]  %s37, 128, %s2, [#allocation5]
    $region17: #{tpu_custom_call.1} parent=1 // pred_fallthru
      _
    // Predicated region
    $region18: #{tpu_custom_call.1} parent=1 // pred_check
      _
    $region19: #{tpu_custom_call.1} parent=1 // pred_check_branch
      %41 = sbr.rel (0) target = $region21
    $region20: #{tpu_custom_call.1} parent=1 // pred_region
      %42 = dma.done [#allocation5], 128
    $region21: #{tpu_custom_call.1} parent=1 // pred_fallthru
      _
    %43 = vsyncpa [#allocation4], 1
    %44 = vsyncpa [#allocation5], 1

</llo_original>
